<compile_context>
chip_gen: v5e
topology: v5e:2x2
jax: 0.10.0
libtpu: 0.0.40
codegen_flags: <defaults>
</compile_context>

<pallas_src>
import jax
import jax.numpy as jnp
from jax.experimental import pallas as pl
from jax.experimental.pallas import tpu as pltpu

INPUT_SIZE = 2
OUTPUT_SIZE = 4


def qnet_kernel(xT_ref, w_ref, b_ref, oT_ref):
    # xT_ref: [IN, TB]  f32 VMEM  (batch on lanes)
    # w_ref : [OUT, IN] f32 SMEM  (torch layout, scalar-indexed)
    # b_ref : [OUT]     f32 SMEM
    # oT_ref: [OUT, TB] f32 VMEM
    in_f = xT_ref.shape[0]
    out_f = oT_ref.shape[0]

    # Lane-dense x rows, loaded once (fully unrolled at trace time: in_f == 2).
    xs = [xT_ref[k:k + 1, :] for k in range(in_f)]

    for o in range(out_f):  # out_f == 4 -> fully unrolled
        # scalar-splat FMAs: w[o,k] (SMEM scalar) * x^T[k,:] ([1, TB] lane-dense row)
        row = xs[0] * w_ref[o, 0]
        for k in range(1, in_f):
            row = row + xs[k] * w_ref[o, k]
        oT_ref[o:o + 1, :] = row + b_ref[o]


def _pick_lane_tile(B):
    """Lane-tile size for the batch axis (multiple of 128 when tiling)."""
    if B <= 8192:
        return B  # single full block (exempt from the 128-lane divisibility rule)
    for tb in (32768, 16384, 8192, 4096, 2048, 1024, 512, 256, 128):
        if B % tb == 0:
            return tb
    # Fallback: single block.  Lane-dense layout keeps this tiny in VMEM
    # (~B*8*4 bytes per buffer), so it is safe even on v7x; it only costs
    # the second TensorCore for oddly-sized huge batches.
    return B


def qnetwork_forward(state, weight, bias):
    """state: [B, input_size] f32; weight: [output_size, input_size]; bias: [output_size]."""
    B, in_f = state.shape
    out_f = weight.shape[0]

    xT = state.T  # [IN, B]: put batch on the lane axis (layout plumbing, not compute)

    tb = _pick_lane_tile(B)
    grid_b = B // tb

    cost = pl.CostEstimate(
        flops=2 * B * in_f * out_f + B * out_f,
        transcendentals=0,
        bytes_accessed=4 * (B * in_f + B * out_f + in_f * out_f + out_f),
    )

    oT = pl.pallas_call(
        qnet_kernel,
        out_shape=jax.ShapeDtypeStruct((out_f, B), jnp.float32),
        grid=(grid_b,),
        in_specs=[
            pl.BlockSpec((in_f, tb), lambda i: (0, i)),              # x^T lane tile
            pl.BlockSpec(memory_space=pltpu.MemorySpace.SMEM),       # weight [out,in]
            pl.BlockSpec(memory_space=pltpu.MemorySpace.SMEM),       # bias [out]
        ],
        out_specs=pl.BlockSpec((out_f, tb), lambda i: (0, i)),       # y^T lane tile
        compiler_params=pltpu.CompilerParams(
            dimension_semantics=("parallel",),
        ),
        cost_estimate=cost,
    )(xT, weight, bias)

    return oT.T  # back to [B, OUT] (nn.Linear output layout)


if __name__ == "__main__":
    key = jax.random.PRNGKey(0)
    k_x, k_w, k_b = jax.random.split(key, 3)

    batch = 8
    # Deterministic "parameters" (mimicking nn.Linear's shapes: W [out, in], b [out]).
    bound = 1.0 / jnp.sqrt(INPUT_SIZE)
    weight = jax.random.uniform(
        k_w, (OUTPUT_SIZE, INPUT_SIZE), jnp.float32, minval=-bound, maxval=bound
    )
    bias = jax.random.uniform(
        k_b, (OUTPUT_SIZE,), jnp.float32, minval=-bound, maxval=bound
    )

    state = jax.random.normal(k_x, (batch, INPUT_SIZE), jnp.float32)

    out = qnetwork_forward(state, weight, bias)
    out = jax.block_until_ready(out)

    # Reference check in plain JAX (same semantics as torch.nn.Linear forward).
    ref = state @ weight.T + bias
    assert out.shape == (batch, OUTPUT_SIZE)
    assert jnp.allclose(out, ref, atol=1e-5), "mismatch vs reference"

    print("KERNEL_OK")
</pallas_src>

<mosaic_0001>
module attributes {stable_mosaic.version = 11 : i64} {
  func.func @qnet_kernel(%arg0: i32, %arg1: memref<2x8xf32, #tpu.memory_space<vmem>>, %arg2: memref<4x2xf32, #tpu.memory_space<smem>>, %arg3: memref<4xf32, #tpu.memory_space<smem>>, %arg4: memref<4x8xf32, #tpu.memory_space<vmem>>) attributes {dimension_semantics = [#tpu.dimension_semantics<parallel>], iteration_bounds = array<i64: 1>, scalar_prefetch = 0 : i64, scratch_operands = 0 : i64, tpu.core_type = #tpu.core_type<tc>, window_params = [{transform_indices = @transform_0, window_bounds = array<i64: 2, 8>}, {transform_indices = @transform_1, window_bounds = array<i64: 4, 2>}, {transform_indices = @transform_2, window_bounds = array<i64: 4>}, {transform_indices = @transform_3, window_bounds = array<i64: 4, 8>}]} {
    %c0 = arith.constant 0 : index
    %c0_0 = arith.constant 0 : index
    %0 = vector.load %arg1[%c0, %c0_0] : memref<2x8xf32, #tpu.memory_space<vmem>>, vector<1x8xf32>
    %c1 = arith.constant 1 : index
    %c0_1 = arith.constant 0 : index
    %1 = vector.load %arg1[%c1, %c0_1] : memref<2x8xf32, #tpu.memory_space<vmem>>, vector<1x8xf32>
    %c0_2 = arith.constant 0 : index
    %c0_3 = arith.constant 0 : index
    %2 = memref.load %arg2[%c0_2, %c0_3] : memref<4x2xf32, #tpu.memory_space<smem>>
    %3 = vector.broadcast %2 : f32 to vector<1x8xf32>
    %4 = arith.mulf %0, %3 : vector<1x8xf32>
    %c0_4 = arith.constant 0 : index
    %c1_5 = arith.constant 1 : index
    %5 = memref.load %arg2[%c0_4, %c1_5] : memref<4x2xf32, #tpu.memory_space<smem>>
    %6 = vector.broadcast %5 : f32 to vector<1x8xf32>
    %7 = arith.mulf %1, %6 : vector<1x8xf32>
    %8 = arith.addf %4, %7 : vector<1x8xf32>
    %c0_6 = arith.constant 0 : index
    %9 = memref.load %arg3[%c0_6] : memref<4xf32, #tpu.memory_space<smem>>
    %10 = vector.broadcast %9 : f32 to vector<1x8xf32>
    %11 = arith.addf %8, %10 : vector<1x8xf32>
    %c0_7 = arith.constant 0 : index
    %c0_8 = arith.constant 0 : index
    %12 = vector.load %arg4[%c0_7, %c0_8] : memref<4x8xf32, #tpu.memory_space<vmem>>, vector<1x8xf32>
    tpu.vector_store %arg4[%c0_7, %c0_8], %11 {strides = array<i32>} : memref<4x8xf32, #tpu.memory_space<vmem>>, vector<1x8xf32>,
    %c1_9 = arith.constant 1 : index
    %c0_10 = arith.constant 0 : index
    %13 = memref.load %arg2[%c1_9, %c0_10] : memref<4x2xf32, #tpu.memory_space<smem>>
    %14 = vector.broadcast %13 : f32 to vector<1x8xf32>
    %15 = arith.mulf %0, %14 : vector<1x8xf32>
    %c1_11 = arith.constant 1 : index
    %c1_12 = arith.constant 1 : index
    %16 = memref.load %arg2[%c1_11, %c1_12] : memref<4x2xf32, #tpu.memory_space<smem>>
    %17 = vector.broadcast %16 : f32 to vector<1x8xf32>
    %18 = arith.mulf %1, %17 : vector<1x8xf32>
    %19 = arith.addf %15, %18 : vector<1x8xf32>
    %c1_13 = arith.constant 1 : index
    %20 = memref.load %arg3[%c1_13] : memref<4xf32, #tpu.memory_space<smem>>
    %21 = vector.broadcast %20 : f32 to vector<1x8xf32>
    %22 = arith.addf %19, %21 : vector<1x8xf32>
    %c1_14 = arith.constant 1 : index
    %c0_15 = arith.constant 0 : index
    %23 = vector.load %arg4[%c1_14, %c0_15] : memref<4x8xf32, #tpu.memory_space<vmem>>, vector<1x8xf32>
    tpu.vector_store %arg4[%c1_14, %c0_15], %22 {strides = array<i32>} : memref<4x8xf32, #tpu.memory_space<vmem>>, vector<1x8xf32>,
    %c2 = arith.constant 2 : index
    %c0_16 = arith.constant 0 : index
    %24 = memref.load %arg2[%c2, %c0_16] : memref<4x2xf32, #tpu.memory_space<smem>>
    %25 = vector.broadcast %24 : f32 to vector<1x8xf32>
    %26 = arith.mulf %0, %25 : vector<1x8xf32>
    %c2_17 = arith.constant 2 : index
    %c1_18 = arith.constant 1 : index
    %27 = memref.load %arg2[%c2_17, %c1_18] : memref<4x2xf32, #tpu.memory_space<smem>>
    %28 = vector.broadcast %27 : f32 to vector<1x8xf32>
    %29 = arith.mulf %1, %28 : vector<1x8xf32>
    %30 = arith.addf %26, %29 : vector<1x8xf32>
    %c2_19 = arith.constant 2 : index
    %31 = memref.load %arg3[%c2_19] : memref<4xf32, #tpu.memory_space<smem>>
    %32 = vector.broadcast %31 : f32 to vector<1x8xf32>
    %33 = arith.addf %30, %32 : vector<1x8xf32>
    %c2_20 = arith.constant 2 : index
    %c0_21 = arith.constant 0 : index
    %34 = vector.load %arg4[%c2_20, %c0_21] : memref<4x8xf32, #tpu.memory_space<vmem>>, vector<1x8xf32>
    tpu.vector_store %arg4[%c2_20, %c0_21], %33 {strides = array<i32>} : memref<4x8xf32, #tpu.memory_space<vmem>>, vector<1x8xf32>,
    %c3 = arith.constant 3 : index
    %c0_22 = arith.constant 0 : index
    %35 = memref.load %arg2[%c3, %c0_22] : memref<4x2xf32, #tpu.memory_space<smem>>
    %36 = vector.broadcast %35 : f32 to vector<1x8xf32>
    %37 = arith.mulf %0, %36 : vector<1x8xf32>
    %c3_23 = arith.constant 3 : index
    %c1_24 = arith.constant 1 : index
    %38 = memref.load %arg2[%c3_23, %c1_24] : memref<4x2xf32, #tpu.memory_space<smem>>
    %39 = vector.broadcast %38 : f32 to vector<1x8xf32>
    %40 = arith.mulf %1, %39 : vector<1x8xf32>
    %41 = arith.addf %37, %40 : vector<1x8xf32>
    %c3_25 = arith.constant 3 : index
    %42 = memref.load %arg3[%c3_25] : memref<4xf32, #tpu.memory_space<smem>>
    %43 = vector.broadcast %42 : f32 to vector<1x8xf32>
    %44 = arith.addf %41, %43 : vector<1x8xf32>
    %c3_26 = arith.constant 3 : index
    %c0_27 = arith.constant 0 : index
    %45 = vector.load %arg4[%c3_26, %c0_27] : memref<4x8xf32, #tpu.memory_space<vmem>>, vector<1x8xf32>
    tpu.vector_store %arg4[%c3_26, %c0_27], %44 {strides = array<i32>} : memref<4x8xf32, #tpu.memory_space<vmem>>, vector<1x8xf32>,
    return
  }
  func.func @transform_0(%arg0: i32) -> (i32, i32) {
    %c0_i32 = arith.constant 0 : i32
    %c0_i32_0 = arith.constant 0 : i32
    return %c0_i32, %arg0 : i32, i32
  }
  func.func @transform_1(%arg0: i32) -> (i32, i32) {
    %c0_i32 = arith.constant 0 : i32
    %c0_i32_0 = arith.constant 0 : i32
    %c0_i32_1 = arith.constant 0 : i32
    return %c0_i32, %c0_i32_0 : i32, i32
  }
  func.func @transform_2(%arg0: i32) -> i32 {
    %c0_i32 = arith.constant 0 : i32
    %c0_i32_0 = arith.constant 0 : i32
    return %c0_i32 : i32
  }
  func.func @transform_3(%arg0: i32) -> (i32, i32) {
    %c0_i32 = arith.constant 0 : i32
    %c0_i32_0 = arith.constant 0 : i32
    return %c0_i32, %arg0 : i32, i32
  }
}

</mosaic_0001>

<llo_original>
// kernel: tpu_custom_call.1
$region0: #{tpu_custom_call.1}
  #allocation0 [shape = 'u32[]', space=smem, size = 0x4, offset = 0x4, fixed_abs, tag = 'smem constant byte address 0x4 - core index']
  #allocation1 [shape = 'u32[72,128]{1,0:T(1,128)}', space=vmem, size = 0x9000, scoped, tag = 'internal scratch']
  %s0 = inlined_call_operand.vmem [shape: f32[2,8], index: 0, kind: input, shape index: {}]
  %s1 = inlined_call_operand.vmem [shape: f32[4,2], index: 1, kind: input, shape index: {}]
  %s2 = inlined_call_operand.vmem [shape: f32[4], index: 2, kind: input, shape index: {}]
  %s3 = inlined_call_operand.hbm [shape: f32[4,8], index: 3, kind: output, shape index: {}]
  %s4 = sld [smem:[#allocation0]]
  $region30: #{tpu_custom_call.1} parent=0
    _
  %s6 = ssub.s32 1, %s4
  %s7 = scalar_select 0, %s6, %s4
  $region1: #{tpu_custom_call.1} parent=0
    #allocation2 [shape = 'u8[2048]{0}', space=smem, size = 0x800, scoped, tag = 'input window, operand 1, single buffered']
    #allocation3 [shape = 's32[1]{0}', space=sflag, size = 0x4, scoped, tag = 'scoped memory for tpu_custom_call.1']
    #allocation4 [shape = 's32[1]{0}', space=sflag, size = 0x4, scoped, tag = 'scoped memory for tpu_custom_call.1']
    #allocation5 [shape = 'u8[512]{0}', space=smem, size = 0x200, scoped, tag = 'input window, operand 2, single buffered']
    #allocation6 [shape = 's32[1]{0}', space=sflag, size = 0x4, scoped, tag = 'scoped memory for tpu_custom_call.1']
    #allocation7 [shape = 'u8[2048]{0}', space=vmem, size = 0x800, scoped, tag = 'output window, operand 0, single buffered']
    %8 = vsyncpa [#allocation4], 0
    %9 = vsyncpa [#allocation6], 0
    %10 = vsyncpa [#allocation3], 0
    // Predicated region
    $region2: #{tpu_custom_call.1} parent=1 // pred_check
      _
    $region3: #{tpu_custom_call.1} parent=1 // pred_check_branch
      %12 = sbr.rel (0) target = $region5
    $region4: #{tpu_custom_call.1} parent=1 // pred_region
      _
    $region5: #{tpu_custom_call.1} parent=1 // pred_fallthru
      _
    // Predicated region
    $region6: #{tpu_custom_call.1} parent=1 // pred_check
      _
    $region7: #{tpu_custom_call.1} parent=1 // pred_check_branch
      %14 = sbr.rel (0) target = $region9
    $region8: #{tpu_custom_call.1} parent=1 // pred_region
      %16 = vsyncadd [#allocation4], 0
      %s18 = sshll.u32 %s1, 4
      %s19 = int_to_ptr.vmem [resolvable:$true] %s18
      %21 = dma.vmem_to_smem %s19, 64, [#allocation2], [#allocation4]
    $region9: #{tpu_custom_call.1} parent=1 // pred_fallthru
      _
    // Predicated region
    $region10: #{tpu_custom_call.1} parent=1 // pred_check
      _
    $region11: #{tpu_custom_call.1} parent=1 // pred_check_branch
      %23 = sbr.rel (0) target = $region13
    $region12: #{tpu_custom_call.1} parent=1 // pred_region
      %25 = vsyncadd [#allocation6], 0
      %s27 = sshll.u32 %s2, 4
      %s28 = int_to_ptr.vmem [resolvable:$true] %s27
      %30 = dma.vmem_to_smem %s28, 16, [#allocation5], [#allocation6]
    $region13: #{tpu_custom_call.1} parent=1 // pred_fallthru
      _
    // Predicated region
    $region14: #{tpu_custom_call.1} parent=1 // pred_check
      _
    $region15: #{tpu_custom_call.1} parent=1 // pred_check_branch
      %32 = sbr.rel (0) target = $region17
    $region16: #{tpu_custom_call.1} parent=1 // pred_region
      %34 = dma.done [#allocation4], 64
    $region17: #{tpu_custom_call.1} parent=1 // pred_fallthru
      _
    // Predicated region
    $region18: #{tpu_custom_call.1} parent=1 // pred_check
      _
    $region19: #{tpu_custom_call.1} parent=1 // pred_check_branch
      %36 = sbr.rel (0) target = $region21
    $region20: #{tpu_custom_call.1} parent=1 // pred_region
      %38 = dma.done [#allocation6], 16
    $region21: #{tpu_custom_call.1} parent=1 // pred_fallthru
      _
    %39 = sfence
    %v40 = vld [vmem:[%s0] sm:$0x1]
    %v41 = vld [vmem:[%s0 + $0x1] sm:$0x1]
    %s42 = sld [smem:[#allocation2]]
    %v43 = vstv %s42
    %v44 = vmul.f32 %v40, %v43
    %s45 = sld [smem:[#allocation2 + $0x1]]
    %v46 = vstv %s45
    %v47 = vmul.f32 %v41, %v46
    %v48 = vadd.f32 %v44, %v47
    %s49 = sld [smem:[#allocation5]]
    %v50 = vstv %s49
    %v51 = vadd.f32 %v48, %v50
    %vm52 = vcmask 57344
    %53 = vst.msk [vmem:[#allocation7] sm:$0x1] %vm52, %v51
    %s54 = sld [smem:[#allocation2 + $0x80]]
    %v55 = vstv %s54
    %v56 = vmul.f32 %v40, %v55
    %s57 = sld [smem:[#allocation2 + $0x81]]
    %v58 = vstv %s57
    %v59 = vmul.f32 %v41, %v58
    %v60 = vadd.f32 %v56, %v59
    %s61 = sld [smem:[#allocation5 + $0x1]]
    %v62 = vstv %s61
    %v63 = vadd.f32 %v60, %v62
    %64 = vst.msk [vmem:[#allocation7 + $0x1] sm:$0x1] %vm52, %v63
    %s65 = sld [smem:[#allocation2 + $0x100]]
    %v66 = vstv %s65
    %v67 = vmul.f32 %v40, %v66
    %s68 = sld [smem:[#allocation2 + $0x101]]
    %v69 = vstv %s68
    %v70 = vmul.f32 %v41, %v69
    %v71 = vadd.f32 %v67, %v70
    %s72 = sld [smem:[#allocation5 + $0x2]]
    %v73 = vstv %s72
    %v74 = vadd.f32 %v71, %v73
    %75 = vst.msk [vmem:[#allocation7 + $0x2] sm:$0x1] %vm52, %v74
    %s76 = sld [smem:[#allocation2 + $0x180]]
    %v77 = vstv %s76
    %v78 = vmul.f32 %v40, %v77
    %s79 = sld [smem:[#allocation2 + $0x181]]
    %v80 = vstv %s79
    %v81 = vmul.f32 %v41, %v80
    %v82 = vadd.f32 %v78, %v81
    %s83 = sld [smem:[#allocation5 + $0x3]]
    %v84 = vstv %s83
    %v85 = vadd.f32 %v82, %v84
    %86 = vst.msk [vmem:[#allocation7 + $0x3] sm:$0x1] %vm52, %v85
    // Predicated region
    $region22: #{tpu_custom_call.1} parent=1 // pred_check
      _
    $region23: #{tpu_custom_call.1} parent=1 // pred_check_branch
      %88 = sbr.rel (0) target = $region25
    $region24: #{tpu_custom_call.1} parent=1 // pred_region
      %90 = vsyncadd [#allocation3], 0
      %s92 = sshll.u32 [#allocation7], 4
      %s93 = int_to_ptr.vmem [resolvable:$true] %s92
      %s94 = sshll.u32 %s3, 4
      %s95 = int_to_ptr.hbm [resolvable:$true] %s94
      %97 = dma.vmem_to_hbm [thread:$0]  %s93, 64, %s95, [#allocation3]
    $region25: #{tpu_custom_call.1} parent=1 // pred_fallthru
      _
    // Predicated region
    $region26: #{tpu_custom_call.1} parent=1 // pred_check
      _
    $region27: #{tpu_custom_call.1} parent=1 // pred_check_branch
      %99 = sbr.rel (0) target = $region29
    $region28: #{tpu_custom_call.1} parent=1 // pred_region
      %101 = dma.done [#allocation3], 64
    $region29: #{tpu_custom_call.1} parent=1 // pred_fallthru
      _
    %102 = vsyncpa [#allocation3], 1
    %103 = vsyncpa [#allocation4], 1
    %104 = vsyncpa [#allocation6], 1

</llo_original>
